<compile_context>
chip_gen: v7x
topology: tpu7x:2x2x1
jax: 0.10.0
libtpu: 0.0.40
codegen_flags: <defaults>
</compile_context>

<pallas_src>
import jax
import jax.numpy as jnp
from jax import lax
from jax.experimental import pallas as pl
from jax.experimental.pallas import tpu as pltpu

MODALITIES = ("language", "video", "audio")
MISSING_TYPE_INDEX = {"language": 1, "video": 2, "audio": 3}
NUM_MODALS = len(MODALITIES)
LN_EPS = 1e-5  # torch.nn.LayerNorm default

# Rows of the packed per-feature constant slab.
_C_PROJ_B, _C_LN_G, _C_LN_B, _C_HEAD_B1, _C_HEAD_B2 = range(5)


def _kernel(miss_ref, xl_ref, xv_ref, xa_ref,
            stat_ref, w_ref, consts_ref, hw1_ref, hw2_ref, out_ref):
    miss = miss_ref[...]      # [TB, 1] int32
    stats = stat_ref[...]     # [3, Df] f32 (median statistics)
    c = consts_ref[...]       # [5, F]  f32 packed per-feature constants

    # --- median filling: replace rows where the modality is missing ---
    xl = jnp.where(miss == MISSING_TYPE_INDEX["language"], stats[0:1, :], xl_ref[...])
    xv = jnp.where(miss == MISSING_TYPE_INDEX["video"],    stats[1:2, :], xv_ref[...])
    xa = jnp.where(miss == MISSING_TYPE_INDEX["audio"],    stats[2:3, :], xa_ref[...])

    # --- projection: three accumulating narrow matmuls + summed bias ---
    # (no lane-dim concat: MXU has slack at K=Df/N=F, XLU shuffle avoided)
    inputs = jnp.dot(xl, w_ref[0], preferred_element_type=jnp.float32)
    inputs = inputs + jnp.dot(xv, w_ref[1], preferred_element_type=jnp.float32)
    inputs = inputs + jnp.dot(xa, w_ref[2], preferred_element_type=jnp.float32)
    inputs = inputs + c[_C_PROJ_B:_C_PROJ_B + 1, :]

    # --- LayerNorm (single-pass moments: var = E[x^2] - mean^2) ---
    mean = jnp.mean(inputs, axis=-1, keepdims=True)
    ex2 = jnp.mean(inputs * inputs, axis=-1, keepdims=True)
    var = ex2 - mean * mean
    normed = (inputs - mean) * lax.rsqrt(var + LN_EPS)
    normed = normed * c[_C_LN_G:_C_LN_G + 1, :] + c[_C_LN_B:_C_LN_B + 1, :]

    # --- Head: Linear -> ReLU -> (Dropout = identity in eval) -> Linear ---
    h = jnp.dot(normed, hw1_ref[...], preferred_element_type=jnp.float32)
    h = jnp.maximum(h + c[_C_HEAD_B1:_C_HEAD_B1 + 1, :], 0.0)
    out_dim = out_ref.shape[-1]
    out_ref[...] = (jnp.dot(h, hw2_ref[...], preferred_element_type=jnp.float32)
                    + c[_C_HEAD_B2:_C_HEAD_B2 + 1, :out_dim])


def _choose_tile_b(B):
    """Large tiles (amortize per-step overhead) but keep >= 2 grid steps so the
    batch axis can shard across 2 TensorCores on v7x."""
    if B <= 8:
        return B                       # too small to split on sublane granularity
    target = min(4096, max(8, B // 2))
    for t in range(target, 7, -1):     # largest multiple of 8 dividing B, <= target
        if B % t == 0 and t % 8 == 0:
            return t
    return B


def modal_median_filling_forward(batch, missing_index, params, *, tile_b=None):
    """batch: dict modality -> [B, feature_dims] f32; missing_index: [B] int."""
    B, Df = batch["language"].shape
    F = params["head_W1"].shape[0]
    O = params["head_W2"].shape[-1]
    assert O <= F, "constant-packing assumes output_dims <= fusion_dim"

    if tile_b is None:
        tile_b = _choose_tile_b(B)
    assert B % tile_b == 0, "demo keeps tile_b | B for simplicity"
    assert tile_b == B or tile_b % 8 == 0

    # Pack the tiny per-feature constants into one [5, F] slab (fewer inputs ->
    # less BlockSpec/DMA bookkeeping). head_b2 (width O) is zero-padded to F.
    consts = jnp.concatenate([
        params["proj_b"].sum(axis=0).reshape(1, F),                  # summed proj bias
        params["ln_g"].reshape(1, F),
        params["ln_b"].reshape(1, F),
        params["head_b1"].reshape(1, F),
        jnp.pad(params["head_b2"].reshape(1, O), ((0, 0), (0, F - O))),
    ], axis=0)

    miss2d = missing_index.reshape(B, 1).astype(jnp.int32)

    def row_spec(width):
        return pl.BlockSpec((tile_b, width), lambda i: (i, 0))

    def const_spec(arr):
        return pl.BlockSpec(arr.shape, lambda i: (0,) * arr.ndim)

    grid = (B // tile_b,)
    out = pl.pallas_call(
        _kernel,
        out_shape=jax.ShapeDtypeStruct((B, O), jnp.float32),
        grid=grid,
        in_specs=[
            row_spec(1),                                   # missing index column
            row_spec(Df), row_spec(Df), row_spec(Df),      # language / video / audio
            const_spec(params["stats"]),                   # [3, Df]
            const_spec(params["proj_W"]),                  # [3, Df, F]
            const_spec(consts),                            # [5, F]
            const_spec(params["head_W1"]),                 # [F, F]
            const_spec(params["head_W2"]),                 # [F, O]
        ],
        # O < 128 -> masked stores; lane-padding would double HBM writeback at
        # these shapes, so left as-is (verify from bundle dump before changing).
        out_specs=pl.BlockSpec((tile_b, O), lambda i: (i, 0)),
        compiler_params=pltpu.CompilerParams(
            dimension_semantics=("parallel",)),
    )(miss2d, batch["language"], batch["video"], batch["audio"],
      params["stats"], params["proj_W"], consts,
      params["head_W1"], params["head_W2"])
    return out


def ref_forward(batch, missing_index, params):
    """Pure-JAX reference replicating the PyTorch forward (eval mode)."""
    total = None
    for i, m in enumerate(MODALITIES):
        mask = (missing_index == MISSING_TYPE_INDEX[m])[:, None]
        data = jnp.where(mask, params["stats"][i][None, :], batch[m])
        proj = data @ params["proj_W"][i] + params["proj_b"][i]
        total = proj if total is None else total + proj
    mean = total.mean(axis=-1, keepdims=True)
    var = ((total - mean) ** 2).mean(axis=-1, keepdims=True)
    normed = (total - mean) / jnp.sqrt(var + LN_EPS) * params["ln_g"] + params["ln_b"]
    h = jnp.maximum(normed @ params["head_W1"] + params["head_b1"], 0.0)
    return h @ params["head_W2"] + params["head_b2"]


def init_params(key, feature_dims, fusion_dim, output_dims):
    ks = jax.random.split(key, 8)
    return {
        "stats":   jax.random.normal(ks[0], (NUM_MODALS, feature_dims), jnp.float32),
        "proj_W":  0.05 * jax.random.normal(ks[1], (NUM_MODALS, feature_dims, fusion_dim), jnp.float32),
        "proj_b":  0.05 * jax.random.normal(ks[2], (NUM_MODALS, 1, fusion_dim), jnp.float32),
        "ln_g":    jnp.ones((1, fusion_dim), jnp.float32),
        "ln_b":    jnp.zeros((1, fusion_dim), jnp.float32),
        "head_W1": 0.05 * jax.random.normal(ks[3], (fusion_dim, fusion_dim), jnp.float32),
        "head_b1": 0.05 * jax.random.normal(ks[4], (1, fusion_dim), jnp.float32),
        "head_W2": 0.05 * jax.random.normal(ks[5], (fusion_dim, output_dims), jnp.float32),
        "head_b2": 0.05 * jax.random.normal(ks[6], (1, output_dims), jnp.float32),
    }


if __name__ == "__main__":
    B, FEATURE_DIMS, FUSION_DIM, OUTPUT_DIMS = 16, 32, 32, 4

    key = jax.random.PRNGKey(0)
    k_lang, k_vid, k_aud, k_par = jax.random.split(key, 4)
    batch = {
        "language": jax.random.normal(k_lang, (B, FEATURE_DIMS), jnp.float32),
        "video":    jax.random.normal(k_vid,  (B, FEATURE_DIMS), jnp.float32),
        "audio":    jax.random.normal(k_aud,  (B, FEATURE_DIMS), jnp.float32),
    }
    # 0 = nothing missing; 1/2/3 = language/video/audio missing for that sample
    missing_index = jnp.array([0, 1, 2, 3] * (B // 4), dtype=jnp.int32)

    params = init_params(k_par, FEATURE_DIMS, FUSION_DIM, OUTPUT_DIMS)

    # tile_b auto-chosen: B=16 -> tile_b=8 -> grid of 2 steps (>= 2 for v7x).
    out = modal_median_filling_forward(batch, missing_index, params)
    out = jax.block_until_ready(out)

    ref = ref_forward(batch, missing_index, params)
    assert out.shape == (B, OUTPUT_DIMS)
    max_err = jnp.max(jnp.abs(out - ref))
    assert jnp.allclose(out, ref, atol=2e-3, rtol=2e-3), (
        f"mismatch: max abs err = {max_err}")

    print("KERNEL_OK")
</pallas_src>

<mosaic_0001>
module attributes {stable_mosaic.version = 11 : i64} {
  func.func @_kernel(%arg0: i32, %arg1: memref<8x1xi32, #tpu.memory_space<vmem>>, %arg2: memref<8x32xf32, #tpu.memory_space<vmem>>, %arg3: memref<8x32xf32, #tpu.memory_space<vmem>>, %arg4: memref<8x32xf32, #tpu.memory_space<vmem>>, %arg5: memref<3x32xf32, #tpu.memory_space<vmem>>, %arg6: memref<3x32x32xf32, #tpu.memory_space<vmem>>, %arg7: memref<5x32xf32, #tpu.memory_space<vmem>>, %arg8: memref<32x32xf32, #tpu.memory_space<vmem>>, %arg9: memref<32x4xf32, #tpu.memory_space<vmem>>, %arg10: memref<8x4xf32, #tpu.memory_space<vmem>>) attributes {dimension_semantics = [#tpu.dimension_semantics<parallel>], iteration_bounds = array<i64: 2>, scalar_prefetch = 0 : i64, scratch_operands = 0 : i64, tpu.core_type = #tpu.core_type<tc>, window_params = [{transform_indices = @transform_0, window_bounds = array<i64: 8, 1>}, {transform_indices = @transform_1, window_bounds = array<i64: 8, 32>}, {transform_indices = @transform_2, window_bounds = array<i64: 8, 32>}, {transform_indices = @transform_3, window_bounds = array<i64: 8, 32>}, {pipeline_mode = #tpu.pipeline_mode<synchronous>, transform_indices = @transform_4, window_bounds = array<i64: 3, 32>}, {pipeline_mode = #tpu.pipeline_mode<synchronous>, transform_indices = @transform_5, window_bounds = array<i64: 3, 32, 32>}, {pipeline_mode = #tpu.pipeline_mode<synchronous>, transform_indices = @transform_6, window_bounds = array<i64: 5, 32>}, {pipeline_mode = #tpu.pipeline_mode<synchronous>, transform_indices = @transform_7, window_bounds = array<i64: 32, 32>}, {pipeline_mode = #tpu.pipeline_mode<synchronous>, transform_indices = @transform_8, window_bounds = array<i64: 32, 4>}, {transform_indices = @transform_9, window_bounds = array<i64: 8, 4>}]} {
    %c0 = arith.constant 0 : index
    %c0_0 = arith.constant 0 : index
    %0 = vector.load %arg1[%c0, %c0_0] : memref<8x1xi32, #tpu.memory_space<vmem>>, vector<8x1xi32>
    %c0_1 = arith.constant 0 : index
    %c0_2 = arith.constant 0 : index
    %1 = vector.load %arg5[%c0_1, %c0_2] : memref<3x32xf32, #tpu.memory_space<vmem>>, vector<3x32xf32>
    %c0_3 = arith.constant 0 : index
    %c0_4 = arith.constant 0 : index
    %2 = vector.load %arg7[%c0_3, %c0_4] : memref<5x32xf32, #tpu.memory_space<vmem>>, vector<5x32xf32>
    %c1_i32 = arith.constant 1 : i32
    %3 = vector.broadcast %c1_i32 : i32 to vector<8x1xi32>
    %4 = arith.cmpi eq, %0, %3 : vector<8x1xi32>
    %5 = vector.extract_strided_slice %1 {offsets = [0, 0], sizes = [1, 32], strides = [1, 1]} : vector<3x32xf32> to vector<1x32xf32>
    %c0_5 = arith.constant 0 : index
    %c0_6 = arith.constant 0 : index
    %6 = vector.load %arg2[%c0_5, %c0_6] : memref<8x32xf32, #tpu.memory_space<vmem>>, vector<8x32xf32>
    %7 = vector.shape_cast %4 : vector<8x1xi1> to vector<8x1xi1>
    %8 = vector.broadcast %7 : vector<8x1xi1> to vector<8x32xi1>
    %9 = vector.shape_cast %5 : vector<1x32xf32> to vector<1x32xf32>
    %10 = vector.broadcast %9 : vector<1x32xf32> to vector<8x32xf32>
    %11 = arith.select %8, %10, %6 : vector<8x32xi1>, vector<8x32xf32>
    %c2_i32 = arith.constant 2 : i32
    %12 = vector.broadcast %c2_i32 : i32 to vector<8x1xi32>
    %13 = arith.cmpi eq, %0, %12 : vector<8x1xi32>
    %14 = vector.extract_strided_slice %1 {offsets = [1, 0], sizes = [1, 32], strides = [1, 1]} : vector<3x32xf32> to vector<1x32xf32>
    %c0_7 = arith.constant 0 : index
    %c0_8 = arith.constant 0 : index
    %15 = vector.load %arg3[%c0_7, %c0_8] : memref<8x32xf32, #tpu.memory_space<vmem>>, vector<8x32xf32>
    %16 = vector.shape_cast %13 : vector<8x1xi1> to vector<8x1xi1>
    %17 = vector.broadcast %16 : vector<8x1xi1> to vector<8x32xi1>
    %18 = vector.shape_cast %14 : vector<1x32xf32> to vector<1x32xf32>
    %19 = vector.broadcast %18 : vector<1x32xf32> to vector<8x32xf32>
    %20 = arith.select %17, %19, %15 : vector<8x32xi1>, vector<8x32xf32>
    %c3_i32 = arith.constant 3 : i32
    %21 = vector.broadcast %c3_i32 : i32 to vector<8x1xi32>
    %22 = arith.cmpi eq, %0, %21 : vector<8x1xi32>
    %23 = vector.extract_strided_slice %1 {offsets = [2, 0], sizes = [1, 32], strides = [1, 1]} : vector<3x32xf32> to vector<1x32xf32>
    %c0_9 = arith.constant 0 : index
    %c0_10 = arith.constant 0 : index
    %24 = vector.load %arg4[%c0_9, %c0_10] : memref<8x32xf32, #tpu.memory_space<vmem>>, vector<8x32xf32>
    %25 = vector.shape_cast %22 : vector<8x1xi1> to vector<8x1xi1>
    %26 = vector.broadcast %25 : vector<8x1xi1> to vector<8x32xi1>
    %27 = vector.shape_cast %23 : vector<1x32xf32> to vector<1x32xf32>
    %28 = vector.broadcast %27 : vector<1x32xf32> to vector<8x32xf32>
    %29 = arith.select %26, %28, %24 : vector<8x32xi1>, vector<8x32xf32>
    %c0_11 = arith.constant 0 : index
    %c0_12 = arith.constant 0 : index
    %c0_13 = arith.constant 0 : index
    %30 = vector.load %arg6[%c0_11, %c0_12, %c0_13] : memref<3x32x32xf32, #tpu.memory_space<vmem>>, vector<1x32x32xf32>
    %31 = vector.shape_cast %30 : vector<1x32x32xf32> to vector<32x32xf32>
    %cst = arith.constant dense<0.000000e+00> : vector<8x32xf32>
    %32 = tpu.matmul %11, %31, %cst {dimension_numbers = #tpu.dot_dimension_numbers<[1], [0], [0], [1], [0, 0, 1, 1], [], []>} : vector<8x32xf32>, vector<32x32xf32>, vector<8x32xf32> -> vector<8x32xf32>
    %c1 = arith.constant 1 : index
    %c0_14 = arith.constant 0 : index
    %c0_15 = arith.constant 0 : index
    %33 = vector.load %arg6[%c1, %c0_14, %c0_15] : memref<3x32x32xf32, #tpu.memory_space<vmem>>, vector<1x32x32xf32>
    %34 = vector.shape_cast %33 : vector<1x32x32xf32> to vector<32x32xf32>
    %cst_16 = arith.constant dense<0.000000e+00> : vector<8x32xf32>
    %35 = tpu.matmul %20, %34, %cst_16 {dimension_numbers = #tpu.dot_dimension_numbers<[1], [0], [0], [1], [0, 0, 1, 1], [], []>} : vector<8x32xf32>, vector<32x32xf32>, vector<8x32xf32> -> vector<8x32xf32>
    %36 = arith.addf %32, %35 : vector<8x32xf32>
    %c2 = arith.constant 2 : index
    %c0_17 = arith.constant 0 : index
    %c0_18 = arith.constant 0 : index
    %37 = vector.load %arg6[%c2, %c0_17, %c0_18] : memref<3x32x32xf32, #tpu.memory_space<vmem>>, vector<1x32x32xf32>
    %38 = vector.shape_cast %37 : vector<1x32x32xf32> to vector<32x32xf32>
    %cst_19 = arith.constant dense<0.000000e+00> : vector<8x32xf32>
    %39 = tpu.matmul %29, %38, %cst_19 {dimension_numbers = #tpu.dot_dimension_numbers<[1], [0], [0], [1], [0, 0, 1, 1], [], []>} : vector<8x32xf32>, vector<32x32xf32>, vector<8x32xf32> -> vector<8x32xf32>
    %40 = arith.addf %36, %39 : vector<8x32xf32>
    %41 = vector.extract_strided_slice %2 {offsets = [0, 0], sizes = [1, 32], strides = [1, 1]} : vector<5x32xf32> to vector<1x32xf32>
    %42 = vector.broadcast %41 : vector<1x32xf32> to vector<8x32xf32>
    %43 = arith.addf %40, %42 : vector<8x32xf32>
    %cst_20 = arith.constant dense<0.000000e+00> : vector<8xf32>
    %44 = vector.multi_reduction <add>, %43, %cst_20 [1] : vector<8x32xf32> to vector<8xf32>
    %45 = vector.shape_cast %44 : vector<8xf32> to vector<8x1xf32>
    %cst_21 = arith.constant 3.200000e+01 : f32
    %46 = vector.broadcast %cst_21 : f32 to vector<8x1xf32>
    %47 = arith.divf %45, %46 : vector<8x1xf32>
    %48 = arith.mulf %43, %43 : vector<8x32xf32>
    %cst_22 = arith.constant dense<0.000000e+00> : vector<8xf32>
    %49 = vector.multi_reduction <add>, %48, %cst_22 [1] : vector<8x32xf32> to vector<8xf32>
    %50 = vector.shape_cast %49 : vector<8xf32> to vector<8x1xf32>
    %cst_23 = arith.constant 3.200000e+01 : f32
    %51 = vector.broadcast %cst_23 : f32 to vector<8x1xf32>
    %52 = arith.divf %50, %51 : vector<8x1xf32>
    %53 = arith.mulf %47, %47 : vector<8x1xf32>
    %54 = arith.subf %52, %53 : vector<8x1xf32>
    %55 = vector.broadcast %47 : vector<8x1xf32> to vector<8x32xf32>
    %56 = arith.subf %43, %55 : vector<8x32xf32>
    %cst_24 = arith.constant 9.99999974E-6 : f32
    %57 = vector.broadcast %cst_24 : f32 to vector<8x1xf32>
    %58 = arith.addf %54, %57 : vector<8x1xf32>
    %59 = math.rsqrt %58 : vector<8x1xf32>
    %60 = vector.broadcast %59 : vector<8x1xf32> to vector<8x32xf32>
    %61 = arith.mulf %56, %60 : vector<8x32xf32>
    %62 = vector.extract_strided_slice %2 {offsets = [1, 0], sizes = [1, 32], strides = [1, 1]} : vector<5x32xf32> to vector<1x32xf32>
    %63 = vector.broadcast %62 : vector<1x32xf32> to vector<8x32xf32>
    %64 = arith.mulf %61, %63 : vector<8x32xf32>
    %65 = vector.extract_strided_slice %2 {offsets = [2, 0], sizes = [1, 32], strides = [1, 1]} : vector<5x32xf32> to vector<1x32xf32>
    %66 = vector.broadcast %65 : vector<1x32xf32> to vector<8x32xf32>
    %67 = arith.addf %64, %66 : vector<8x32xf32>
    %c0_25 = arith.constant 0 : index
    %c0_26 = arith.constant 0 : index
    %68 = vector.load %arg8[%c0_25, %c0_26] : memref<32x32xf32, #tpu.memory_space<vmem>>, vector<32x32xf32>
    %cst_27 = arith.constant dense<0.000000e+00> : vector<8x32xf32>
    %69 = tpu.matmul %67, %68, %cst_27 {dimension_numbers = #tpu.dot_dimension_numbers<[1], [0], [0], [1], [0, 0, 1, 1], [], []>} : vector<8x32xf32>, vector<32x32xf32>, vector<8x32xf32> -> vector<8x32xf32>
    %70 = vector.extract_strided_slice %2 {offsets = [3, 0], sizes = [1, 32], strides = [1, 1]} : vector<5x32xf32> to vector<1x32xf32>
    %71 = vector.broadcast %70 : vector<1x32xf32> to vector<8x32xf32>
    %72 = arith.addf %69, %71 : vector<8x32xf32>
    %cst_28 = arith.constant 0.000000e+00 : f32
    %73 = vector.broadcast %cst_28 : f32 to vector<8x32xf32>
    %74 = arith.maximumf %72, %73 : vector<8x32xf32>
    %c0_29 = arith.constant 0 : index
    %c0_30 = arith.constant 0 : index
    %75 = vector.load %arg9[%c0_29, %c0_30] : memref<32x4xf32, #tpu.memory_space<vmem>>, vector<32x4xf32>
    %cst_31 = arith.constant dense<0.000000e+00> : vector<8x4xf32>
    %76 = tpu.matmul %74, %75, %cst_31 {dimension_numbers = #tpu.dot_dimension_numbers<[1], [0], [0], [1], [0, 0, 1, 1], [], []>} : vector<8x32xf32>, vector<32x4xf32>, vector<8x4xf32> -> vector<8x4xf32>
    %77 = vector.extract_strided_slice %2 {offsets = [4, 0], sizes = [1, 4], strides = [1, 1]} : vector<5x32xf32> to vector<1x4xf32>
    %78 = vector.broadcast %77 : vector<1x4xf32> to vector<8x4xf32>
    %79 = arith.addf %76, %78 : vector<8x4xf32>
    %c0_32 = arith.constant 0 : index
    %c0_33 = arith.constant 0 : index
    %80 = vector.load %arg10[%c0_32, %c0_33] : memref<8x4xf32, #tpu.memory_space<vmem>>, vector<8x4xf32>
    tpu.vector_store %arg10[%c0_32, %c0_33], %79 {strides = array<i32>} : memref<8x4xf32, #tpu.memory_space<vmem>>, vector<8x4xf32>,
    return
  }
  func.func @transform_0(%arg0: i32) -> (i32, i32) {
    %c0_i32 = arith.constant 0 : i32
    %c0_i32_0 = arith.constant 0 : i32
    return %arg0, %c0_i32 : i32, i32
  }
  func.func @transform_1(%arg0: i32) -> (i32, i32) {
    %c0_i32 = arith.constant 0 : i32
    %c0_i32_0 = arith.constant 0 : i32
    return %arg0, %c0_i32 : i32, i32
  }
  func.func @transform_2(%arg0: i32) -> (i32, i32) {
    %c0_i32 = arith.constant 0 : i32
    %c0_i32_0 = arith.constant 0 : i32
    return %arg0, %c0_i32 : i32, i32
  }
  func.func @transform_3(%arg0: i32) -> (i32, i32) {
    %c0_i32 = arith.constant 0 : i32
    %c0_i32_0 = arith.constant 0 : i32
    return %arg0, %c0_i32 : i32, i32
  }
  func.func @transform_4(%arg0: i32) -> (i32, i32) {
    %c0_i32 = arith.constant 0 : i32
    %c0_i32_0 = arith.constant 0 : i32
    %c0_i32_1 = arith.constant 0 : i32
    return %c0_i32, %c0_i32_0 : i32, i32
  }
  func.func @transform_5(%arg0: i32) -> (i32, i32, i32) {
    %c0_i32 = arith.constant 0 : i32
    %c0_i32_0 = arith.constant 0 : i32
    %c0_i32_1 = arith.constant 0 : i32
    %c0_i32_2 = arith.constant 0 : i32
    return %c0_i32, %c0_i32_0, %c0_i32_1 : i32, i32, i32
  }
  func.func @transform_6(%arg0: i32) -> (i32, i32) {
    %c0_i32 = arith.constant 0 : i32
    %c0_i32_0 = arith.constant 0 : i32
    %c0_i32_1 = arith.constant 0 : i32
    return %c0_i32, %c0_i32_0 : i32, i32
  }
  func.func @transform_7(%arg0: i32) -> (i32, i32) {
    %c0_i32 = arith.constant 0 : i32
    %c0_i32_0 = arith.constant 0 : i32
    %c0_i32_1 = arith.constant 0 : i32
    return %c0_i32, %c0_i32_0 : i32, i32
  }
  func.func @transform_8(%arg0: i32) -> (i32, i32) {
    %c0_i32 = arith.constant 0 : i32
    %c0_i32_0 = arith.constant 0 : i32
    %c0_i32_1 = arith.constant 0 : i32
    return %c0_i32, %c0_i32_0 : i32, i32
  }
  func.func @transform_9(%arg0: i32) -> (i32, i32) {
    %c0_i32 = arith.constant 0 : i32
    %c0_i32_0 = arith.constant 0 : i32
    return %arg0, %c0_i32 : i32, i32
  }
}

</mosaic_0001>

<llo_original>
// kernel: tpu_custom_call.1
$region0: #{tpu_custom_call.1}
  #allocation0 [shape = 'u32[]', space=smem, size = 0x4, offset = 0x4, fixed_abs, tag = 'smem constant byte address 0x4 - core index']
  #allocation1 [shape = 'u32[144,128]{1,0:T(1,128)}', space=vmem, size = 0x12000, scoped, tag = 'internal scratch']
  %s0 = inlined_call_operand.vmem [shape: s32[16,1], index: 0, kind: input, shape index: {}]
  %s1 = inlined_call_operand.vmem [shape: f32[16,32], index: 1, kind: input, shape index: {}]
  %s2 = inlined_call_operand.vmem [shape: f32[16,32], index: 2, kind: input, shape index: {}]
  %s3 = inlined_call_operand.hbm [shape: f32[16,32], index: 3, kind: input, shape index: {}]
  %s4 = inlined_call_operand.hbm [shape: f32[3,32], index: 4, kind: input, shape index: {}]
  %s5 = inlined_call_operand.hbm [shape: f32[3,32,32], index: 5, kind: input, shape index: {}]
  %s6 = inlined_call_operand.vmem [shape: f32[5,32], index: 6, kind: input, shape index: {}]
  %s7 = inlined_call_operand.vmem [shape: f32[32,32], index: 7, kind: input, shape index: {}]
  %s8 = inlined_call_operand.vmem [shape: f32[32,4], index: 8, kind: input, shape index: {}]
  %s9 = inlined_call_operand.vmem [shape: f32[16,4], index: 9, kind: output, shape index: {}]
  %s10 = sld [smem:[#allocation0]]
  $region81: #{tpu_custom_call.1} parent=0
    _
  %s12 = ssub.s32 1, %s10
  %s13 = scalar_select 0, %s12, %s10
  $region1: #{tpu_custom_call.1} parent=0
    #allocation2 [shape = 'u8[8192]{0}', space=vmem, size = 0x2000, scoped, tag = 'input window, operand 3']
    #allocation3 [shape = 's32[2]{0}', space=sflag, size = 0x8, scoped, tag = 'scoped memory for tpu_custom_call.1']
    #allocation4 [shape = 'u8[2048]{0}', space=vmem, size = 0x800, scoped, tag = 'input window, operand 4, single buffered']
    #allocation5 [shape = 's32[1]{0}', space=sflag, size = 0x4, scoped, tag = 'scoped memory for tpu_custom_call.1']
    #allocation6 [shape = 'u8[49152]{0}', space=vmem, size = 0xc000, scoped, tag = 'input window, operand 5, single buffered']
    %14 = vsyncpa [#allocation3], 0
    %s15 = scalar_lea.sflag [#allocation3], 1
    %16 = vsyncpa %s15, 0
    %17 = vsyncpa [#allocation5], 0
    loop: start=0, step=1, limit=4
    $region2: #{tpu_custom_call.1} parent=1 // loop_pre_header
      _
    $region3: #{tpu_custom_call.1} parent=1 // loop_header
      %s19 = sphi 0, %s23
      %p20 = scmp.ge.s32.totalorder %s19, 4
      %s29 = sphi 0, %s31
      %s32 = sphi 0, %s29
      %s33 = sphi 0, %s32
      %s49 = sphi 0, %s33
      %s55 = sphi 0, %s57
      %s58 = sphi 0, %s55
      %s59 = sphi 0, %s58
      %s75 = sphi 0, %s59
      %s81 = sphi 0, %s83
      %s84 = sphi 0, %s81
      %s85 = sphi 0, %s84
      %s101 = sphi 0, %s85
      %s107 = sphi 0, %s109
      %s110 = sphi 0, %s107
      %s111 = sphi 0, %s110
      %s127 = sphi 0, %s111
      %s131 = sphi 0, %s131
      %s133 = sphi 0, %s131
      %s134 = sphi 0, %s133
      %s148 = sphi 0, %s134
      %s152 = sphi 0, %s152
      %s154 = sphi 0, %s152
      %s155 = sphi 0, %s154
      %s169 = sphi 0, %s155
      %s173 = sphi 0, %s173
      %s175 = sphi 0, %s173
      %s176 = sphi 0, %s175
      %s190 = sphi 0, %s176
      %s194 = sphi 0, %s194
      %s196 = sphi 0, %s194
      %s197 = sphi 0, %s196
      %s211 = sphi 0, %s197
      %s215 = sphi 0, %s215
      %s217 = sphi 0, %s215
      %s218 = sphi 0, %s217
      %s232 = sphi 0, %s218
      %s238 = sphi 0, %s240
      %s241 = sphi 0, %s238
      %s242 = sphi 0, %s241
      %s258 = sphi 0, %s242
    $region4: #{tpu_custom_call.1} parent=1 // loop_header_branch
      %22 = sbr.rel (%p20) target = $region8
    $region5: #{tpu_custom_call.1} parent=1 // loop_body
      %s24 = ssub.s32 %s19, 1
      %s25 = ssub.s32 %s19, 2
      %s26 = sadd.s32 %s19, 1
      %s27 = ssub.s32 %s19, %s26
      %p28 = scmp.eq.s32.totalorder %s27, 0
      %s30 = sadd.s32 %s29, 1
      %s31 = scalar_select %p28, %s29, %s30
      %p34 = pneg %p28
      %p35 = scmp.eq.s32.totalorder %s19, 1
      %p36 = por %p34, %p35
      %p37 = scmp.ne.s32.totalorder %s29, %s32
      %p38 = scmp.eq.s32.totalorder %s19, 0
      %p39 = por %p37, %p38
      %p40 = scmp.ne.s32.totalorder %s29, %s32
      %p41 = scmp.eq.s32.totalorder %s24, 1
      %p42 = por %p40, %p41
      %p43 = scmp.ne.s32.totalorder %s32, %s33
      %p44 = scmp.eq.s32.totalorder %s24, 0
      %p45 = por %p43, %p44
      %p46 = scmp.ne.s32.totalorder %s32, %s33
      %p47 = scmp.eq.s32.totalorder %s25, 1
      %p48 = por %p46, %p47
      %p50 = scmp.ne.s32.totalorder %s33, %s49
      %p51 = scmp.eq.s32.totalorder %s25, 0
      %p52 = por %p50, %p51
      %s53 = ssub.s32 %s19, %s26
      %p54 = scmp.eq.s32.totalorder %s53, 0
      %s56 = sadd.s32 %s55, 1
      %s57 = scalar_select %p54, %s55, %s56
      %p60 = pneg %p54
      %p61 = scmp.eq.s32.totalorder %s19, 1
      %p62 = por %p60, %p61
      %p63 = scmp.ne.s32.totalorder %s55, %s58
      %p64 = scmp.eq.s32.totalorder %s19, 0
      %p65 = por %p63, %p64
      %p66 = scmp.ne.s32.totalorder %s55, %s58
      %p67 = scmp.eq.s32.totalorder %s24, 1
      %p68 = por %p66, %p67
      %p69 = scmp.ne.s32.totalorder %s58, %s59
      %p70 = scmp.eq.s32.totalorder %s24, 0
      %p71 = por %p69, %p70
      %p72 = scmp.ne.s32.totalorder %s58, %s59
      %p73 = scmp.eq.s32.totalorder %s25, 1
      %p74 = por %p72, %p73
      %p76 = scmp.ne.s32.totalorder %s59, %s75
      %p77 = scmp.eq.s32.totalorder %s25, 0
      %p78 = por %p76, %p77
      %s79 = ssub.s32 %s19, %s26
      %p80 = scmp.eq.s32.totalorder %s79, 0
      %s82 = sadd.s32 %s81, 1
      %s83 = scalar_select %p80, %s81, %s82
      %p86 = pneg %p80
      %p87 = scmp.eq.s32.totalorder %s19, 1
      %p88 = por %p86, %p87
      %p89 = scmp.ne.s32.totalorder %s81, %s84
      %p90 = scmp.eq.s32.totalorder %s19, 0
      %p91 = por %p89, %p90
      %p92 = scmp.ne.s32.totalorder %s81, %s84
      %p93 = scmp.eq.s32.totalorder %s24, 1
      %p94 = por %p92, %p93
      %p95 = scmp.ne.s32.totalorder %s84, %s85
      %p96 = scmp.eq.s32.totalorder %s24, 0
      %p97 = por %p95, %p96
      %p98 = scmp.ne.s32.totalorder %s84, %s85
      %p99 = scmp.eq.s32.totalorder %s25, 1
      %p100 = por %p98, %p99
      %p102 = scmp.ne.s32.totalorder %s85, %s101
      %p103 = scmp.eq.s32.totalorder %s25, 0
      %p104 = por %p102, %p103
      %s105 = ssub.s32 %s19, %s26
      %p106 = scmp.eq.s32.totalorder %s105, 0
      %s108 = sadd.s32 %s107, 1
      %s109 = scalar_select %p106, %s107, %s108
      %p112 = pneg %p106
      %p113 = scmp.eq.s32.totalorder %s19, 1
      %p114 = por %p112, %p113
      %p115 = scmp.ne.s32.totalorder %s107, %s110
      %p116 = scmp.eq.s32.totalorder %s19, 0
      %p117 = por %p115, %p116
      %p118 = scmp.ne.s32.totalorder %s107, %s110
      %p119 = scmp.eq.s32.totalorder %s24, 1
      %p120 = por %p118, %p119
      %p121 = scmp.ne.s32.totalorder %s110, %s111
      %p122 = scmp.eq.s32.totalorder %s24, 0
      %p123 = por %p121, %p122
      %p124 = scmp.ne.s32.totalorder %s110, %s111
      %p125 = scmp.eq.s32.totalorder %s25, 1
      %p126 = por %p124, %p125
      %p128 = scmp.ne.s32.totalorder %s111, %s127
      %p129 = scmp.eq.s32.totalorder %s25, 0
      %p130 = por %p128, %p129
      %s132 = sadd.s32 %s131, 1
      %p135 = scmp.eq.s32.totalorder %s19, 1
      %p136 = scmp.ne.s32.totalorder %s131, %s133
      %p137 = scmp.eq.s32.totalorder %s19, 0
      %p138 = por %p136, %p137
      %p139 = scmp.ne.s32.totalorder %s131, %s133
      %p140 = scmp.eq.s32.totalorder %s24, 1
      %p141 = por %p139, %p140
      %p142 = scmp.ne.s32.totalorder %s133, %s134
      %p143 = scmp.eq.s32.totalorder %s24, 0
      %p144 = por %p142, %p143
      %p145 = scmp.ne.s32.totalorder %s133, %s134
      %p146 = scmp.eq.s32.totalorder %s25, 1
      %p147 = por %p145, %p146
      %p149 = scmp.ne.s32.totalorder %s134, %s148
      %p150 = scmp.eq.s32.totalorder %s25, 0
      %p151 = por %p149, %p150
      %s153 = sadd.s32 %s152, 1
      %p156 = scmp.eq.s32.totalorder %s19, 1
      %p157 = scmp.ne.s32.totalorder %s152, %s154
      %p158 = scmp.eq.s32.totalorder %s19, 0
      %p159 = por %p157, %p158
      %p160 = scmp.ne.s32.totalorder %s152, %s154
      %p161 = scmp.eq.s32.totalorder %s24, 1
      %p162 = por %p160, %p161
      %p163 = scmp.ne.s32.totalorder %s154, %s155
      %p164 = scmp.eq.s32.totalorder %s24, 0
      %p165 = por %p163, %p164
      %p166 = scmp.ne.s32.totalorder %s154, %s155
      %p167 = scmp.eq.s32.totalorder %s25, 1
      %p168 = por %p166, %p167
      %p170 = scmp.ne.s32.totalorder %s155, %s169
      %p171 = scmp.eq.s32.totalorder %s25, 0
      %p172 = por %p170, %p171
      %s174 = sadd.s32 %s173, 1
      %p177 = scmp.eq.s32.totalorder %s19, 1
      %p178 = scmp.ne.s32.totalorder %s173, %s175
      %p179 = scmp.eq.s32.totalorder %s19, 0
      %p180 = por %p178, %p179
      %p181 = scmp.ne.s32.totalorder %s173, %s175
      %p182 = scmp.eq.s32.totalorder %s24, 1
      %p183 = por %p181, %p182
      %p184 = scmp.ne.s32.totalorder %s175, %s176
      %p185 = scmp.eq.s32.totalorder %s24, 0
      %p186 = por %p184, %p185
      %p187 = scmp.ne.s32.totalorder %s175, %s176
      %p188 = scmp.eq.s32.totalorder %s25, 1
      %p189 = por %p187, %p188
      %p191 = scmp.ne.s32.totalorder %s176, %s190
      %p192 = scmp.eq.s32.totalorder %s25, 0
      %p193 = por %p191, %p192
      %s195 = sadd.s32 %s194, 1
      %p198 = scmp.eq.s32.totalorder %s19, 1
      %p199 = scmp.ne.s32.totalorder %s194, %s196
      %p200 = scmp.eq.s32.totalorder %s19, 0
      %p201 = por %p199, %p200
      %p202 = scmp.ne.s32.totalorder %s194, %s196
      %p203 = scmp.eq.s32.totalorder %s24, 1
      %p204 = por %p202, %p203
      %p205 = scmp.ne.s32.totalorder %s196, %s197
      %p206 = scmp.eq.s32.totalorder %s24, 0
      %p207 = por %p205, %p206
      %p208 = scmp.ne.s32.totalorder %s196, %s197
      %p209 = scmp.eq.s32.totalorder %s25, 1
      %p210 = por %p208, %p209
      %p212 = scmp.ne.s32.totalorder %s197, %s211
      %p213 = scmp.eq.s32.totalorder %s25, 0
      %p214 = por %p212, %p213
      %s216 = sadd.s32 %s215, 1
      %p219 = scmp.eq.s32.totalorder %s19, 1
      %p220 = scmp.ne.s32.totalorder %s215, %s217
      %p221 = scmp.eq.s32.totalorder %s19, 0
      %p222 = por %p220, %p221
      %p223 = scmp.ne.s32.totalorder %s215, %s217
      %p224 = scmp.eq.s32.totalorder %s24, 1
      %p225 = por %p223, %p224
      %p226 = scmp.ne.s32.totalorder %s217, %s218
      %p227 = scmp.eq.s32.totalorder %s24, 0
      %p228 = por %p226, %p227
      %p229 = scmp.ne.s32.totalorder %s217, %s218
      %p230 = scmp.eq.s32.totalorder %s25, 1
      %p231 = por %p229, %p230
      %p233 = scmp.ne.s32.totalorder %s218, %s232
      %p234 = scmp.eq.s32.totalorder %s25, 0
      %p235 = por %p233, %p234
      %s236 = ssub.s32 %s19, %s26
      %p237 = scmp.eq.s32.totalorder %s236, 0
      %s239 = sadd.s32 %s238, 1
      %s240 = scalar_select %p237, %s238, %s239
      %p243 = pneg %p237
      %p244 = scmp.eq.s32.totalorder %s19, 1
      %p245 = por %p243, %p244
      %p246 = scmp.ne.s32.totalorder %s238, %s241
      %p247 = scmp.eq.s32.totalorder %s19, 0
      %p248 = por %p246, %p247
      %p249 = scmp.ne.s32.totalorder %s238, %s241
      %p250 = scmp.eq.s32.totalorder %s24, 1
      %p251 = por %p249, %p250
      %p252 = scmp.ne.s32.totalorder %s241, %s242
      %p253 = scmp.eq.s32.totalorder %s24, 0
      %p254 = por %p252, %p253
      %p255 = scmp.ne.s32.totalorder %s241, %s242
      %p256 = scmp.eq.s32.totalorder %s25, 1
      %p257 = por %p255, %p256
      %p259 = scmp.ne.s32.totalorder %s242, %s258
      %p260 = scmp.eq.s32.totalorder %s25, 0
      %p261 = por %p259, %p260
      %p262 = scmp.le.s32.totalorder 1, %s19
      %p263 = scmp.lt.s32.totalorder %s19, 3
      %p264 = pnand %p262, %p263
      %p265 = pneg %p264
      // Predicated region
      $region9: #{tpu_custom_call.1} parent=5 // pred_check
        _
      $region10: #{tpu_custom_call.1} parent=5 // pred_check_branch
        %267 = sbr.rel (%p264) target = $region12
      $region11: #{tpu_custom_call.1} parent=5 // pred_region
        %s268 = ssub.s32 %s19, 1
        // Predicated region
        $region13: #{tpu_custom_call.1} parent=11 // pred_check
          %p269 = pneg %p144
        $region14: #{tpu_custom_call.1} parent=11 // pred_check_branch
          %271 = sbr.rel (%p269) target = $region16
        $region15: #{tpu_custom_call.1} parent=11 // pred_region
          %s273 = ssub.s32 64, 64
          %274 = vsyncadd [#allocation5], %s273
          %s276 = sshll.u32 [#allocation4], 4
          %s277 = int_to_ptr.vmem [resolvable:$true] %s276
          %279 = dma.hbm_to_vmem [thread:$0]  %s4, 64, %s277, [#allocation5]
        $region16: #{tpu_custom_call.1} parent=11 // pred_fallthru
          _
        // Predicated region
        $region17: #{tpu_custom_call.1} parent=11 // pred_check
          %p280 = pneg %p165
        $region18: #{tpu_custom_call.1} parent=11 // pred_check_branch
          %282 = sbr.rel (%p280) target = $region20
        $region19: #{tpu_custom_call.1} parent=11 // pred_region
          %s284 = ssub.s32 1536, 1536
          %285 = vsyncadd [#allocation5], %s284
          %s286 = sshll.u32 [#allocation6], 4
          %s287 = int_to_ptr.vmem [resolvable:$true] %s286
          %292 = dma.hbm_to_vmem [thread:$0]  %s5, 1536, %s287, [#allocation5], 128, 128, 8
        $region20: #{tpu_custom_call.1} parent=11 // pred_fallthru
          _
        // Predicated region
        $region21: #{tpu_custom_call.1} parent=11 // pred_check
          %p293 = pneg %p186
        $region22: #{tpu_custom_call.1} parent=11 // pred_check_branch
          %295 = sbr.rel (%p293) target = $region24
        $region23: #{tpu_custom_call.1} parent=11 // pred_region
          _
        $region24: #{tpu_custom_call.1} parent=11 // pred_fallthru
          _
        // Predicated region
        $region25: #{tpu_custom_call.1} parent=11 // pred_check
          %p296 = pneg %p207
        $region26: #{tpu_custom_call.1} parent=11 // pred_check_branch
          %298 = sbr.rel (%p296) target = $region28
        $region27: #{tpu_custom_call.1} parent=11 // pred_region
          _
        $region28: #{tpu_custom_call.1} parent=11 // pred_fallthru
          _
        // Predicated region
        $region29: #{tpu_custom_call.1} parent=11 // pred_check
          %p299 = pneg %p228
        $region30: #{tpu_custom_call.1} parent=11 // pred_check_branch
          %301 = sbr.rel (%p299) target = $region32
        $region31: #{tpu_custom_call.1} parent=11 // pred_region
          _
        $region32: #{tpu_custom_call.1} parent=11 // pred_fallthru
          _
      $region12: #{tpu_custom_call.1} parent=5 // pred_fallthru
        _
      %p302 = scmp.lt.s32.totalorder %s19, 2
      // Predicated region
      $region33: #{tpu_custom_call.1} parent=5 // pred_check
        %p303 = pneg %p302
      $region34: #{tpu_custom_call.1} parent=5 // pred_check_branch
        %305 = sbr.rel (%p303) target = $region36
      $region35: #{tpu_custom_call.1} parent=5 // pred_region
        // Predicated region
        $region37: #{tpu_custom_call.1} parent=35 // pred_check
          %p306 = pneg %p39
        $region38: #{tpu_custom_call.1} parent=35 // pred_check_branch
          %308 = sbr.rel (%p306) target = $region40
        $region39: #{tpu_custom_call.1} parent=35 // pred_region
          %p309 = scmp.lt.s32.totalorder %s19, 1
          %s310 = scalar_select %p309, %s19, 1
          %s311 = smul.addr %s310, 8
          %s312 = scalar_lea.vmem %s0, %s311
        $region40: #{tpu_custom_call.1} parent=35 // pred_fallthru
          _
        // Predicated region
        $region41: #{tpu_custom_call.1} parent=35 // pred_check
          %p313 = pneg %p65
        $region42: #{tpu_custom_call.1} parent=35 // pred_check_branch
          %315 = sbr.rel (%p313) target = $region44
        $region43: #{tpu_custom_call.1} parent=35 // pred_region
          %p316 = scmp.lt.s32.totalorder %s19, 1
          %s317 = scalar_select %p316, %s19, 1
          %s318 = smul.addr %s317, 8
          %s319 = scalar_lea.vmem %s1, %s318
        $region44: #{tpu_custom_call.1} parent=35 // pred_fallthru
          _
        // Predicated region
        $region45: #{tpu_custom_call.1} parent=35 // pred_check
          %p320 = pneg %p91
        $region46: #{tpu_custom_call.1} parent=35 // pred_check_branch
          %322 = sbr.rel (%p320) target = $region48
        $region47: #{tpu_custom_call.1} parent=35 // pred_region
          %p323 = scmp.lt.s32.totalorder %s19, 1
          %s324 = scalar_select %p323, %s19, 1
          %s325 = smul.addr %s324, 8
          %s326 = scalar_lea.vmem %s2, %s325
        $region48: #{tpu_custom_call.1} parent=35 // pred_fallthru
          _
        // Predicated region
        $region49: #{tpu_custom_call.1} parent=35 // pred_check
          %p327 = pneg %p117
        $region50: #{tpu_custom_call.1} parent=35 // pred_check_branch
          %329 = sbr.rel (%p327) target = $region52
        $region51: #{tpu_custom_call.1} parent=35 // pred_region
          %s330 = sand.u32 %s107, 1
          %s331 = scalar_lea.sflag [#allocation3], %s330
          %s332 = sand.u32 %s107, 1
          %s333 = smul.addr %s332, 8
          %s334 = scalar_lea.vmem [#allocation2], %s333
          %s336 = ssub.s32 128, 128
          %337 = vsyncadd %s331, %s336
          %s338 = smul.addr %s19, 128
          %s339 = scalar_lea.hbm %s3, %s338
          %s341 = sshll.u32 %s334, 4
          %s342 = int_to_ptr.vmem [resolvable:$true] %s341
          %344 = dma.hbm_to_vmem [thread:$0]  %s339, 128, %s342, %s331
        $region52: #{tpu_custom_call.1} parent=35 // pred_fallthru
          _
      $region36: #{tpu_custom_call.1} parent=5 // pred_fallthru
        _
      %p345 = scmp.le.s32.totalorder 1, %s19
      %p346 = scmp.lt.s32.totalorder %s19, 3
      %p347 = pnand %p345, %p346
      %p348 = pneg %p347
      // Predicated region
      $region53: #{tpu_custom_call.1} parent=5 // pred_check
        _
      $region54: #{tpu_custom_call.1} parent=5 // pred_check_branch
        %350 = sbr.rel (%p347) target = $region56
      $region55: #{tpu_custom_call.1} parent=5 // pred_region
        %s351 = ssub.s32 %s19, 1
        %s352 = sand.u32 %s110, 1
        %s353 = scalar_lea.sflag [#allocation3], %s352
        %s354 = sand.u32 %s110, 1
        %s355 = smul.addr %s354, 8
        %s356 = scalar_lea.vmem [#allocation2], %s355
        // Predicated region
        $region57: #{tpu_custom_call.1} parent=55 // pred_check
          %p357 = pneg %p123
        $region58: #{tpu_custom_call.1} parent=55 // pred_check_branch
          %359 = sbr.rel (%p357) target = $region60
        $region59: #{tpu_custom_call.1} parent=55 // pred_region
          %360 = dma.done %s353, 128
        $region60: #{tpu_custom_call.1} parent=55 // pred_fallthru
          _
        // Predicated region
        $region61: #{tpu_custom_call.1} parent=55 // pred_check
          %p361 = pneg %p144
        $region62: #{tpu_custom_call.1} parent=55 // pred_check_branch
          %363 = sbr.rel (%p361) target = $region64
        $region63: #{tpu_custom_call.1} parent=55 // pred_region
          %364 = dma.done [#allocation5], 64
        $region64: #{tpu_custom_call.1} parent=55 // pred_fallthru
          _
        // Predicated region
        $region65: #{tpu_custom_call.1} parent=55 // pred_check
          %p365 = pneg %p165
        $region66: #{tpu_custom_call.1} parent=55 // pred_check_branch
          %367 = sbr.rel (%p365) target = $region68
        $region67: #{tpu_custom_call.1} parent=55 // pred_region
          %368 = dma.done [#allocation5], 1536
        $region68: #{tpu_custom_call.1} parent=55 // pred_fallthru
          _
        %p369 = scmp.lt.s32.totalorder %s24, 1
        %s370 = scalar_select %p369, %s24, 1
        %s371 = smul.addr %s370, 8
        %s372 = scalar_lea.vmem %s0, %s371
        %p373 = pneg %p45
        %p374 = pneg %p42
        %p375 = scmp.lt.s32.totalorder %s24, 1
        %s376 = scalar_select %p375, %s24, 1
        %s377 = smul.addr %s376, 8
        %s378 = scalar_lea.vmem %s1, %s377
        %p379 = pneg %p71
        %p380 = pneg %p68
        %p381 = scmp.lt.s32.totalorder %s24, 1
        %s382 = scalar_select %p381, %s24, 1
        %s383 = smul.addr %s382, 8
        %s384 = scalar_lea.vmem %s2, %s383
        %p385 = pneg %p97
        %p386 = pneg %p94
        %s387 = sand.u32 %s110, 1
        %s388 = scalar_lea.sflag [#allocation3], %s387
        %s389 = sand.u32 %s110, 1
        %s390 = smul.addr %s389, 8
        %s391 = scalar_lea.vmem [#allocation2], %s390
        %p392 = pneg %p123
        %p393 = pneg %p120
        %p394 = pneg %p144
        %p395 = pneg %p141
        %p396 = pneg %p165
        %p397 = pneg %p162
        %p398 = pneg %p186
        %p399 = pneg %p183
        %p400 = pneg %p207
        %p401 = pneg %p204
        %p402 = pneg %p228
        %p403 = pneg %p225
        %p404 = pneg %p254
        %p405 = pneg %p251
        %p406 = scmp.lt.s32.totalorder %s24, 1
        %s407 = scalar_select %p406, %s24, 1
        %s408 = smul.addr %s407, 8
        %s409 = scalar_lea.vmem %s9, %s408
        %p410 = scmp.lt.s32.totalorder %s24, 1
        %s411 = scalar_select %p410, %s24, 1
        %s412 = smul.addr %s411, 8
        %s413 = scalar_lea.vmem %s0, %s412
        %p414 = scmp.lt.s32.totalorder %s24, 1
        %s415 = scalar_select %p414, %s24, 1
        %s416 = smul.addr %s415, 8
        %s417 = scalar_lea.vmem %s1, %s416
        %p418 = scmp.lt.s32.totalorder %s24, 1
        %s419 = scalar_select %p418, %s24, 1
        %s420 = smul.addr %s419, 8
        %s421 = scalar_lea.vmem %s2, %s420
        %p422 = scmp.lt.s32.totalorder %s24, 1
        %s423 = scalar_select %p422, %s24, 1
        %s424 = smul.addr %s423, 8
        %s425 = scalar_lea.vmem %s9, %s424
        %v426 = vld [vmem:[%s413] sm:$0xff]
        %v427 = vld [vmem:[#allocation4] sm:$0x7]
        %v428 = vld [vmem:[%s6] sm:$0x1f]
        %vm429 = vcmp.eq.s32.totalorder %v426, 1
        %v430 = vld [vmem:[%s417] sm:$0xff]
        %v431 = vsel %vm429, 1, 0
        %432 = vset.pattern.permute.xlu0 0
        %433 = vperm.xlu0 %432, %v431
        %v434 = vpop.permute.xlu0 %433
        %vm435 = vcmp.eq.s32.totalorder %v434, 1
        %v436 = vlaneseq
        %v437 = vshrl.u32 %v436, 7
        %v438 = vsub.s32 0, %v437
        %v439 = vrot.slane %v427, %v438
        %v440 = vsel %vm435, %v439, %v430
        %vm441 = vcmp.eq.s32.totalorder %v426, 2
        %v442 = vld [vmem:[%s421] sm:$0xff]
        %v443 = vsel %vm441, 1, 0
        %444 = vset.pattern.permute.xlu0 0
        %445 = vperm.xlu0 %444, %v443
        %v446 = vpop.permute.xlu0 %445
        %vm447 = vcmp.eq.s32.totalorder %v446, 1
        %v448 = vlaneseq
        %v449 = vshrl.u32 %v448, 7
        %v450 = vsub.s32 1, %v449
        %v451 = vrot.slane %v427, %v450
        %v452 = vsel %vm447, %v451, %v442
        %vm453 = vcmp.eq.s32.totalorder %v426, 3
        %v454 = vld [vmem:[%s356] sm:$0xff]
        %v455 = vsel %vm453, 1, 0
        %456 = vset.pattern.permute.xlu0 0
        %457 = vperm.xlu0 %456, %v455
        %v458 = vpop.permute.xlu0 %457
        %vm459 = vcmp.eq.s32.totalorder %v458, 1
        %v460 = vlaneseq
        %v461 = vshrl.u32 %v460, 7
        %v462 = vsub.s32 2, %v461
        %v463 = vrot.slane %v427, %v462
        %v464 = vsel %vm459, %v463, %v454
        %v465 = vld [vmem:[#allocation6] sm:$0xff]
        %v466 = vld [vmem:[#allocation6 + $0x8] sm:$0xff]
        %v467 = vld [vmem:[#allocation6 + $0x10] sm:$0xff]
        %v468 = vld [vmem:[#allocation6 + $0x18] sm:$0xff]
        %s469 = scalar_lea.vmem [#allocation6], 32
        %v470 = vld [vmem:[%s469] sm:$0xff]
        %v471 = vld [vmem:[%s469 + $0x8] sm:$0xff]
        %v472 = vld [vmem:[%s469 + $0x10] sm:$0xff]
        %v473 = vld [vmem:[%s469 + $0x18] sm:$0xff]
        %vm474 = vcmask 261120
        %v476 = vsel %vm474, %v452, 0
        %478 = vmatprep.subr.mxu0 0.0
        %479 = vmatpush1.msra.mxu0 %v470
        %480 = vmatprep.subr.mxu0 0.0
        %481 = vmatpush1.msra.mxu0 %v471
        %482 = vmatprep.subr.mxu0 0.0
        %483 = vmatpush1.msra.mxu0 %v472
        %484 = vmatprep.subr.mxu0 0.0
        %485 = vmatpush1.msra.mxu0 %v473
        %486 = vmatprep.subr.mxu0 0.0
        %487 = vmatpush1.msra.mxu0 0.0
        %488 = vmatprep.subr.mxu0 0.0
        %489 = vmatpush1.msra.mxu0 0.0
        %490 = vmatprep.subr.mxu0 0.0
        %491 = vmatpush1.msra.mxu0 0.0
        %492 = vmatprep.subr.mxu0 0.0
        %493 = vmatpush1.msra.mxu0 0.0
        %494 = vmatprep.subr.mxu0 0.0
        %495 = vmatpush1.msra.mxu0 0.0
        %496 = vmatprep.subr.mxu0 0.0
        %497 = vmatpush1.msra.mxu0 0.0
        %498 = vmatprep.subr.mxu0 0.0
        %499 = vmatpush1.msra.mxu0 0.0
        %500 = vmatprep.subr.mxu0 0.0
        %501 = vmatpush1.msra.mxu0 0.0
        %502 = vmatprep.subr.mxu0 0.0
        %503 = vmatpush1.msra.mxu0 0.0
        %504 = vmatprep.subr.mxu0 0.0
        %505 = vmatpush1.msra.mxu0 0.0
        %506 = vmatprep.subr.mxu0 0.0
        %507 = vmatpush1.msra.mxu0 0.0
        %508 = vmatprep.subr.mxu0 0.0
        %509 = vmatpush1.msra.mxu0 0.0
        %510 = vmatprep.subr.mxu0 0.0
        %511 = vmatpush1.msra.mxu0 0.0
        %512 = vmatprep.subr.mxu0 0.0
        %513 = vmatpush1.msra.mxu0 0.0
        %514 = vmatprep.subr.mxu0 0.0
        %515 = vmatpush1.msra.mxu0 0.0
        %516 = vmatprep.subr.mxu0 0.0
        %517 = vmatpush1.msra.mxu0 0.0
        %518 = vmatprep.subr.mxu0 0.0
        %519 = vmatpush1.msra.mxu0 0.0
        %520 = vmatprep.subr.mxu0 0.0
        %521 = vmatpush1.msra.mxu0 0.0
        %522 = vmatprep.subr.mxu0 0.0
        %523 = vmatpush1.msra.mxu0 0.0
        %524 = vmatprep.subr.mxu0 0.0
        %525 = vmatpush1.msra.mxu0 0.0
        %526 = vmatprep.subr.mxu0 0.0
        %527 = vmatpush1.msra.mxu0 0.0
        %528 = vmatprep.subr.mxu0 0.0
        %529 = vmatpush1.msra.mxu0 0.0
        %530 = vmatprep.subr.mxu0 0.0
        %531 = vmatpush1.msra.mxu0 0.0
        %532 = vmatprep.subr.mxu0 0.0
        %533 = vmatpush1.msra.mxu0 0.0
        %534 = vmatprep.subr.mxu0 0.0
        %535 = vmatpush1.msra.mxu0 0.0
        %536 = vmatprep.subr.mxu0 0.0
        %537 = vmatpush1.msra.mxu0 0.0
        %538 = vmatprep.subr.mxu0 0.0
        %539 = vmatpush1.msra.mxu0 0.0
        %540 = vmatprep.subr.mxu0 0.0
        %541 = vmatpush1.msra.mxu0 0.0
        %542 = vmatprep.mubr.f32.mxu0 0.0
        %543 = vmatmul.mubr.f32.gmra.mrb[0].mxu0 %v476
        %v544 = vpop.f32.mrb[0].mxu0
        %v545 = vadd.f32 0.0, %v544
        %v546 = vpop.f32.mrb[0].mxu0
        %547 = vdwg.mxu0
        %v549 = vsel %vm474, %v440, 0
        %551 = vmatprep.subr.mxu0 0.0
        %552 = vmatpush1.msra.mxu0 %v465
        %553 = vmatprep.subr.mxu0 0.0
        %554 = vmatpush1.msra.mxu0 %v466
        %555 = vmatprep.subr.mxu0 0.0
        %556 = vmatpush1.msra.mxu0 %v467
        %557 = vmatprep.subr.mxu0 0.0
        %558 = vmatpush1.msra.mxu0 %v468
        %559 = vmatprep.subr.mxu0 0.0
        %560 = vmatpush1.msra.mxu0 0.0
        %561 = vmatprep.subr.mxu0 0.0
        %562 = vmatpush1.msra.mxu0 0.0
        %563 = vmatprep.subr.mxu0 0.0
        %564 = vmatpush1.msra.mxu0 0.0
        %565 = vmatprep.subr.mxu0 0.0
        %566 = vmatpush1.msra.mxu0 0.0
        %567 = vmatprep.subr.mxu0 0.0
        %568 = vmatpush1.msra.mxu0 0.0
        %569 = vmatprep.subr.mxu0 0.0
        %570 = vmatpush1.msra.mxu0 0.0
        %571 = vmatprep.subr.mxu0 0.0
        %572 = vmatpush1.msra.mxu0 0.0
        %573 = vmatprep.subr.mxu0 0.0
        %574 = vmatpush1.msra.mxu0 0.0
        %575 = vmatprep.subr.mxu0 0.0
        %576 = vmatpush1.msra.mxu0 0.0
        %577 = vmatprep.subr.mxu0 0.0
        %578 = vmatpush1.msra.mxu0 0.0
        %579 = vmatprep.subr.mxu0 0.0
        %580 = vmatpush1.msra.mxu0 0.0
        %581 = vmatprep.subr.mxu0 0.0
        %582 = vmatpush1.msra.mxu0 0.0
        %583 = vmatprep.subr.mxu0 0.0
        %584 = vmatpush1.msra.mxu0 0.0
        %585 = vmatprep.subr.mxu0 0.0
        %586 = vmatpush1.msra.mxu0 0.0
        %587 = vmatprep.subr.mxu0 0.0
        %588 = vmatpush1.msra.mxu0 0.0
        %589 = vmatprep.subr.mxu0 0.0
        %590 = vmatpush1.msra.mxu0 0.0
        %591 = vmatprep.subr.mxu0 0.0
        %592 = vmatpush1.msra.mxu0 0.0
        %593 = vmatprep.subr.mxu0 0.0
        %594 = vmatpush1.msra.mxu0 0.0
        %595 = vmatprep.subr.mxu0 0.0
        %596 = vmatpush1.msra.mxu0 0.0
        %597 = vmatprep.subr.mxu0 0.0
        %598 = vmatpush1.msra.mxu0 0.0
        %599 = vmatprep.subr.mxu0 0.0
        %600 = vmatpush1.msra.mxu0 0.0
        %601 = vmatprep.subr.mxu0 0.0
        %602 = vmatpush1.msra.mxu0 0.0
        %603 = vmatprep.subr.mxu0 0.0
        %604 = vmatpush1.msra.mxu0 0.0
        %605 = vmatprep.subr.mxu0 0.0
        %606 = vmatpush1.msra.mxu0 0.0
        %607 = vmatprep.subr.mxu0 0.0
        %608 = vmatpush1.msra.mxu0 0.0
        %609 = vmatprep.subr.mxu0 0.0
        %610 = vmatpush1.msra.mxu0 0.0
        %611 = vmatprep.subr.mxu0 0.0
        %612 = vmatpush1.msra.mxu0 0.0
        %613 = vmatprep.subr.mxu0 0.0
        %614 = vmatpush1.msra.mxu0 0.0
        %615 = vmatprep.mubr.f32.mxu0 0.0
        %616 = vmatmul.mubr.f32.gmra.mrb[0].mxu0 %v549
        %v617 = vpop.f32.mrb[0].mxu0
        %v618 = vadd.f32 %v545, %v617
        %v619 = vpop.f32.mrb[0].mxu0
        %620 = vdwg.mxu0
        %s621 = scalar_lea.vmem [#allocation6], 64
        %v622 = vld [vmem:[%s621] sm:$0xff]
        %v623 = vld [vmem:[%s621 + $0x8] sm:$0xff]
        %v624 = vld [vmem:[%s621 + $0x10] sm:$0xff]
        %v625 = vld [vmem:[%s621 + $0x18] sm:$0xff]
        %v627 = vsel %vm474, %v464, 0
        %629 = vmatprep.subr.mxu0 0.0
        %630 = vmatpush1.msra.mxu0 %v622
        %631 = vmatprep.subr.mxu0 0.0
        %632 = vmatpush1.msra.mxu0 %v623
        %633 = vmatprep.subr.mxu0 0.0
        %634 = vmatpush1.msra.mxu0 %v624
        %635 = vmatprep.subr.mxu0 0.0
        %636 = vmatpush1.msra.mxu0 %v625
        %637 = vmatprep.subr.mxu0 0.0
        %638 = vmatpush1.msra.mxu0 0.0
        %639 = vmatprep.subr.mxu0 0.0
        %640 = vmatpush1.msra.mxu0 0.0
        %641 = vmatprep.subr.mxu0 0.0
        %642 = vmatpush1.msra.mxu0 0.0
        %643 = vmatprep.subr.mxu0 0.0
        %644 = vmatpush1.msra.mxu0 0.0
        %645 = vmatprep.subr.mxu0 0.0
        %646 = vmatpush1.msra.mxu0 0.0
        %647 = vmatprep.subr.mxu0 0.0
        %648 = vmatpush1.msra.mxu0 0.0
        %649 = vmatprep.subr.mxu0 0.0
        %650 = vmatpush1.msra.mxu0 0.0
        %651 = vmatprep.subr.mxu0 0.0
        %652 = vmatpush1.msra.mxu0 0.0
        %653 = vmatprep.subr.mxu0 0.0
        %654 = vmatpush1.msra.mxu0 0.0
        %655 = vmatprep.subr.mxu0 0.0
        %656 = vmatpush1.msra.mxu0 0.0
        %657 = vmatprep.subr.mxu0 0.0
        %658 = vmatpush1.msra.mxu0 0.0
        %659 = vmatprep.subr.mxu0 0.0
        %660 = vmatpush1.msra.mxu0 0.0
        %661 = vmatprep.subr.mxu0 0.0
        %662 = vmatpush1.msra.mxu0 0.0
        %663 = vmatprep.subr.mxu0 0.0
        %664 = vmatpush1.msra.mxu0 0.0
        %665 = vmatprep.subr.mxu0 0.0
        %666 = vmatpush1.msra.mxu0 0.0
        %667 = vmatprep.subr.mxu0 0.0
        %668 = vmatpush1.msra.mxu0 0.0
        %669 = vmatprep.subr.mxu0 0.0
        %670 = vmatpush1.msra.mxu0 0.0
        %671 = vmatprep.subr.mxu0 0.0
        %672 = vmatpush1.msra.mxu0 0.0
        %673 = vmatprep.subr.mxu0 0.0
        %674 = vmatpush1.msra.mxu0 0.0
        %675 = vmatprep.subr.mxu0 0.0
        %676 = vmatpush1.msra.mxu0 0.0
        %677 = vmatprep.subr.mxu0 0.0
        %678 = vmatpush1.msra.mxu0 0.0
        %679 = vmatprep.subr.mxu0 0.0
        %680 = vmatpush1.msra.mxu0 0.0
        %681 = vmatprep.subr.mxu0 0.0
        %682 = vmatpush1.msra.mxu0 0.0
        %683 = vmatprep.subr.mxu0 0.0
        %684 = vmatpush1.msra.mxu0 0.0
        %685 = vmatprep.subr.mxu0 0.0
        %686 = vmatpush1.msra.mxu0 0.0
        %687 = vmatprep.subr.mxu0 0.0
        %688 = vmatpush1.msra.mxu0 0.0
        %689 = vmatprep.subr.mxu0 0.0
        %690 = vmatpush1.msra.mxu0 0.0
        %691 = vmatprep.subr.mxu0 0.0
        %692 = vmatpush1.msra.mxu0 0.0
        %693 = vmatprep.mubr.f32.mxu0 0.0
        %694 = vmatmul.mubr.f32.gmra.mrb[0].mxu0 %v627
        %v695 = vpop.f32.mrb[0].mxu0
        %v696 = vadd.f32 0.0, %v695
        %v697 = vpop.f32.mrb[0].mxu0
        %698 = vdwg.mxu0
        %v699 = vadd.f32 %v618, %v696
        %v700 = vlaneseq
        %v701 = vshrl.u32 %v700, 7
        %v702 = vsub.s32 0, %v701
        %v703 = vrot.slane %v428, %v702
        %v704 = vadd.f32 %v699, %v703
        %v705 = vsel %vm474, %v704, 0.0
        %706 = vadd.xlane.f32.xlu0 %v705
        %v707 = vpop.xlane.xlu0 %706
        %v708 = vrcp.pop 32.0
        %v709 = vmul.f32 %v707, %v708
        %v710 = vmul.f32 %v704, %v704
        %v711 = vsel %vm474, %v710, 0.0
        %712 = vadd.xlane.f32.xlu0 %v711
        %v713 = vpop.xlane.xlu0 %712
        %v714 = vmul.f32 %v713, %v708
        %v715 = vmul.f32 %v709, %v709
        %v716 = vsub.f32 %v714, %v715
        %v717 = vsub.f32 %v704, %v709
        %v718 = vadd.f32 %v716, 1e-05
        %v719 = vrsqrt.pop %v718
        %v720 = vmul.f32 %v717, %v719
        %v721 = vlaneseq
        %v722 = vshrl.u32 %v721, 7
        %v723 = vsub.s32 1, %v722
        %v724 = vrot.slane %v428, %v723
        %v725 = vmul.f32 %v720, %v724
        %v726 = vlaneseq
        %v727 = vshrl.u32 %v726, 7
        %v728 = vsub.s32 2, %v727
        %v729 = vrot.slane %v428, %v728
        %v730 = vadd.f32 %v725, %v729
        %v731 = vld [vmem:[%s7] sm:$0xff]
        %v732 = vld [vmem:[%s7 + $0x8] sm:$0xff]
        %v733 = vld [vmem:[%s7 + $0x10] sm:$0xff]
        %v734 = vld [vmem:[%s7 + $0x18] sm:$0xff]
        %v735 = vlaneseq
        %v736 = vshrl.u32 %v735, 7
        %v737 = vsub.s32 3, %v736
        %v738 = vrot.slane %v428, %v737
        %v740 = vsel %vm474, %v730, 0
        %742 = vmatprep.subr.mxu0 0.0
        %743 = vmatpush1.msra.mxu0 %v731
        %744 = vmatprep.subr.mxu0 0.0
        %745 = vmatpush1.msra.mxu0 %v732
        %746 = vmatprep.subr.mxu0 0.0
        %747 = vmatpush1.msra.mxu0 %v733
        %748 = vmatprep.subr.mxu0 0.0
        %749 = vmatpush1.msra.mxu0 %v734
        %750 = vmatprep.subr.mxu0 0.0
        %751 = vmatpush1.msra.mxu0 0.0
        %752 = vmatprep.subr.mxu0 0.0
        %753 = vmatpush1.msra.mxu0 0.0
        %754 = vmatprep.subr.mxu0 0.0
        %755 = vmatpush1.msra.mxu0 0.0
        %756 = vmatprep.subr.mxu0 0.0
        %757 = vmatpush1.msra.mxu0 0.0
        %758 = vmatprep.subr.mxu0 0.0
        %759 = vmatpush1.msra.mxu0 0.0
        %760 = vmatprep.subr.mxu0 0.0
        %761 = vmatpush1.msra.mxu0 0.0
        %762 = vmatprep.subr.mxu0 0.0
        %763 = vmatpush1.msra.mxu0 0.0
        %764 = vmatprep.subr.mxu0 0.0
        %765 = vmatpush1.msra.mxu0 0.0
        %766 = vmatprep.subr.mxu0 0.0
        %767 = vmatpush1.msra.mxu0 0.0
        %768 = vmatprep.subr.mxu0 0.0
        %769 = vmatpush1.msra.mxu0 0.0
        %770 = vmatprep.subr.mxu0 0.0
        %771 = vmatpush1.msra.mxu0 0.0
        %772 = vmatprep.subr.mxu0 0.0
        %773 = vmatpush1.msra.mxu0 0.0
        %774 = vmatprep.subr.mxu0 0.0
        %775 = vmatpush1.msra.mxu0 0.0
        %776 = vmatprep.subr.mxu0 0.0
        %777 = vmatpush1.msra.mxu0 0.0
        %778 = vmatprep.subr.mxu0 0.0
        %779 = vmatpush1.msra.mxu0 0.0
        %780 = vmatprep.subr.mxu0 0.0
        %781 = vmatpush1.msra.mxu0 0.0
        %782 = vmatprep.subr.mxu0 0.0
        %783 = vmatpush1.msra.mxu0 0.0
        %784 = vmatprep.subr.mxu0 0.0
        %785 = vmatpush1.msra.mxu0 0.0
        %786 = vmatprep.subr.mxu0 0.0
        %787 = vmatpush1.msra.mxu0 0.0
        %788 = vmatprep.subr.mxu0 0.0
        %789 = vmatpush1.msra.mxu0 0.0
        %790 = vmatprep.subr.mxu0 0.0
        %791 = vmatpush1.msra.mxu0 0.0
        %792 = vmatprep.subr.mxu0 0.0
        %793 = vmatpush1.msra.mxu0 0.0
        %794 = vmatprep.subr.mxu0 0.0
        %795 = vmatpush1.msra.mxu0 0.0
        %796 = vmatprep.subr.mxu0 0.0
        %797 = vmatpush1.msra.mxu0 0.0
        %798 = vmatprep.subr.mxu0 0.0
        %799 = vmatpush1.msra.mxu0 0.0
        %800 = vmatprep.subr.mxu0 0.0
        %801 = vmatpush1.msra.mxu0 0.0
        %802 = vmatprep.subr.mxu0 0.0
        %803 = vmatpush1.msra.mxu0 0.0
        %804 = vmatprep.subr.mxu0 0.0
        %805 = vmatpush1.msra.mxu0 0.0
        %806 = vmatprep.mubr.f32.mxu0 0.0
        %807 = vmatmul.mubr.f32.gmra.mrb[0].mxu0 %v740
        %v808 = vpop.f32.mrb[0].mxu0
        %v809 = vadd.f32 %v738, %v808
        %v810 = vpop.f32.mrb[0].mxu0
        %811 = vdwg.mxu0
        %v812 = vmax.f32 %v809, 0.0
        %v813 = vld [vmem:[%s8] sm:$0xff]
        %v814 = vld [vmem:[%s8 + $0x8] sm:$0xff]
        %v815 = vld [vmem:[%s8 + $0x10] sm:$0xff]
        %v816 = vld [vmem:[%s8 + $0x18] sm:$0xff]
        %v817 = vlaneseq
        %v818 = vshrl.u32 %v817, 7
        %v819 = vsub.s32 4, %v818
        %v820 = vrot.slane %v428, %v819
        %v822 = vsel %vm474, %v812, 0
        %824 = vmatprep.subr.mxu0 0.0
        %825 = vmatpush1.msra.mxu0 %v813
        %826 = vmatprep.subr.mxu0 0.0
        %827 = vmatpush1.msra.mxu0 %v814
        %828 = vmatprep.subr.mxu0 0.0
        %829 = vmatpush1.msra.mxu0 %v815
        %830 = vmatprep.subr.mxu0 0.0
        %831 = vmatpush1.msra.mxu0 %v816
        %832 = vmatprep.subr.mxu0 0.0
        %833 = vmatpush1.msra.mxu0 0.0
        %834 = vmatprep.subr.mxu0 0.0
        %835 = vmatpush1.msra.mxu0 0.0
        %836 = vmatprep.subr.mxu0 0.0
        %837 = vmatpush1.msra.mxu0 0.0
        %838 = vmatprep.subr.mxu0 0.0
        %839 = vmatpush1.msra.mxu0 0.0
        %840 = vmatprep.subr.mxu0 0.0
        %841 = vmatpush1.msra.mxu0 0.0
        %842 = vmatprep.subr.mxu0 0.0
        %843 = vmatpush1.msra.mxu0 0.0
        %844 = vmatprep.subr.mxu0 0.0
        %845 = vmatpush1.msra.mxu0 0.0
        %846 = vmatprep.subr.mxu0 0.0
        %847 = vmatpush1.msra.mxu0 0.0
        %848 = vmatprep.subr.mxu0 0.0
        %849 = vmatpush1.msra.mxu0 0.0
        %850 = vmatprep.subr.mxu0 0.0
        %851 = vmatpush1.msra.mxu0 0.0
        %852 = vmatprep.subr.mxu0 0.0
        %853 = vmatpush1.msra.mxu0 0.0
        %854 = vmatprep.subr.mxu0 0.0
        %855 = vmatpush1.msra.mxu0 0.0
        %856 = vmatprep.subr.mxu0 0.0
        %857 = vmatpush1.msra.mxu0 0.0
        %858 = vmatprep.subr.mxu0 0.0
        %859 = vmatpush1.msra.mxu0 0.0
        %860 = vmatprep.subr.mxu0 0.0
        %861 = vmatpush1.msra.mxu0 0.0
        %862 = vmatprep.subr.mxu0 0.0
        %863 = vmatpush1.msra.mxu0 0.0
        %864 = vmatprep.subr.mxu0 0.0
        %865 = vmatpush1.msra.mxu0 0.0
        %866 = vmatprep.subr.mxu0 0.0
        %867 = vmatpush1.msra.mxu0 0.0
        %868 = vmatprep.subr.mxu0 0.0
        %869 = vmatpush1.msra.mxu0 0.0
        %870 = vmatprep.subr.mxu0 0.0
        %871 = vmatpush1.msra.mxu0 0.0
        %872 = vmatprep.subr.mxu0 0.0
        %873 = vmatpush1.msra.mxu0 0.0
        %874 = vmatprep.subr.mxu0 0.0
        %875 = vmatpush1.msra.mxu0 0.0
        %876 = vmatprep.subr.mxu0 0.0
        %877 = vmatpush1.msra.mxu0 0.0
        %878 = vmatprep.subr.mxu0 0.0
        %879 = vmatpush1.msra.mxu0 0.0
        %880 = vmatprep.subr.mxu0 0.0
        %881 = vmatpush1.msra.mxu0 0.0
        %882 = vmatprep.subr.mxu0 0.0
        %883 = vmatpush1.msra.mxu0 0.0
        %884 = vmatprep.subr.mxu0 0.0
        %885 = vmatpush1.msra.mxu0 0.0
        %886 = vmatprep.subr.mxu0 0.0
        %887 = vmatpush1.msra.mxu0 0.0
        %888 = vmatprep.mubr.f32.mxu0 0.0
        %889 = vmatmul.mubr.f32.gmra.mrb[0].mxu0 %v822
        %v890 = vpop.f32.mrb[0].mxu0
        %v891 = vadd.f32 %v820, %v890
        %v892 = vpop.f32.mrb[0].mxu0
        %893 = vdwg.mxu0
        %vm894 = vcmask 31744
        %895 = vst.msk [vmem:[%s425] sm:$0xff] %vm894, %v891
        %p896 = scmp.lt.s32.totalorder %s24, 1
        %s897 = scalar_select %p896, %s24, 1
        %s898 = smul.addr %s897, 8
        %s899 = scalar_lea.vmem %s9, %s898
        // Predicated region
        $region69: #{tpu_custom_call.1} parent=55 // pred_check
          %p900 = pneg %p251
        $region70: #{tpu_custom_call.1} parent=55 // pred_check_branch
          %902 = sbr.rel (%p900) target = $region72
        $region71: #{tpu_custom_call.1} parent=55 // pred_region
          _
        $region72: #{tpu_custom_call.1} parent=55 // pred_fallthru
          _
      $region56: #{tpu_custom_call.1} parent=5 // pred_fallthru
        _
      %p903 = scmp.le.s32.totalorder 2, %s19
      // Predicated region
      $region73: #{tpu_custom_call.1} parent=5 // pred_check
        %p904 = pneg %p903
      $region74: #{tpu_custom_call.1} parent=5 // pred_check_branch
        %906 = sbr.rel (%p904) target = $region76
      $region75: #{tpu_custom_call.1} parent=5 // pred_region
        %s907 = ssub.s32 %s19, 2
        // Predicated region
        $region77: #{tpu_custom_call.1} parent=75 // pred_check
          %p908 = pneg %p257
        $region78: #{tpu_custom_call.1} parent=75 // pred_check_branch
          %910 = sbr.rel (%p908) target = $region80
        $region79: #{tpu_custom_call.1} parent=75 // pred_region
          %p911 = scmp.lt.s32.totalorder %s25, 1
          %s912 = scalar_select %p911, %s25, 1
          %s913 = smul.addr %s912, 8
          %s914 = scalar_lea.vmem %s9, %s913
        $region80: #{tpu_custom_call.1} parent=75 // pred_fallthru
          _
      $region76: #{tpu_custom_call.1} parent=5 // pred_fallthru
        _
    $region6: #{tpu_custom_call.1} parent=1 // loop_footer
      %s23 = sadd.s32 1, %s19
    $region7: #{tpu_custom_call.1} parent=1 // loop_footer_branch
      %18 = sbr.rel target = $region3
    $region8: #{tpu_custom_call.1} parent=1 // loop_exit
      _
    %915 = vsyncpa [#allocation3], 1
    %s916 = scalar_lea.sflag [#allocation3], 1
    %917 = vsyncpa %s916, 1
    %918 = vsyncpa [#allocation5], 1

</llo_original>
